<compile_context>
chip_gen: v6e
topology: v6e:2x2x1
jax: 0.10.0
libtpu: 0.0.40
codegen_flags: <defaults>
</compile_context>

<pallas_src>
import jax
import jax.numpy as jnp
from jax.experimental import pallas as pl
from jax.experimental.pallas import tpu as pltpu

IN_DIM = 28 * 28          # 784
IN_PAD = 896              # 7 * 128: lane-aligned K for the x DMA / first matmul
H1 = 128
H2 = 64
OUT_DIM = 10
OUT_PAD = 128             # lane-dense output block; wrapper slices [:, :10]
MAX_BATCH_TILE = 512      # multiple of 256 (v6e/v7x MXU rows); fits v5e VMEM


def _pick_batch_tile(batch):
    """512-row tiles for real batches; one sublane-aligned tile for tiny ones."""
    if batch >= MAX_BATCH_TILE:
        return MAX_BATCH_TILE
    return max(8, ((batch + 7) // 8) * 8)


def mlp_kernel(x_ref, w1_ref, b1_ref, w2_ref, b2_ref, w3_ref, b3_ref, o_ref):
    """Fused 3-layer MLP forward on one batch tile (bf16 matmuls, f32 accum)."""
    x = x_ref[...]                                                        # (bm, 896) bf16
    h1 = jnp.dot(x, w1_ref[...], preferred_element_type=jnp.float32)      # (bm, 128) f32
    h1 = jnp.maximum(h1 + b1_ref[...], 0.0)                               # bias + ReLU in f32
    h2 = jnp.dot(h1.astype(jnp.bfloat16), w2_ref[...],
                 preferred_element_type=jnp.float32)                      # (bm, 64)
    h2 = jnp.maximum(h2 + b2_ref[...], 0.0)
    out = jnp.dot(h2.astype(jnp.bfloat16), w3_ref[...],
                  preferred_element_type=jnp.float32)                     # (bm, 128)
    o_ref[...] = (out + b3_ref[...]).astype(o_ref.dtype)


@jax.jit
def mlp_forward(x, w1, b1, w2, b2, w3, b3):
    """x: (B,1,28,28) / (B,28,28) / (B,784) float32 -> logits (B, 10) float32."""
    x = x.reshape(-1, IN_DIM).astype(jnp.float32)          # x.view(-1, 28*28)
    B = x.shape[0]

    bm = _pick_batch_tile(B)
    B_pad = ((B + bm - 1) // bm) * bm

    # bf16, lane/sublane-aligned input stream (the dominant HBM traffic).
    x_p = jnp.pad(x, ((0, B_pad - B), (0, IN_PAD - IN_DIM))).astype(jnp.bfloat16)

    # Weights as (in, out) = PyTorch weight.T; zero-pad to the aligned dims.
    w1_p = jnp.pad(w1, ((0, IN_PAD - IN_DIM), (0, 0))).astype(jnp.bfloat16)
    w2_p = w2.astype(jnp.bfloat16)
    w3_p = jnp.pad(w3, ((0, 0), (0, OUT_PAD - OUT_DIM))).astype(jnp.bfloat16)
    b1r = b1.reshape(1, H1).astype(jnp.float32)
    b2r = b2.reshape(1, H2).astype(jnp.float32)
    b3r = jnp.pad(b3.reshape(1, OUT_DIM),
                  ((0, 0), (0, OUT_PAD - OUT_DIM))).astype(jnp.float32)

    grid = (B_pad // bm,)

    out = pl.pallas_call(
        mlp_kernel,
        out_shape=jax.ShapeDtypeStruct((B_pad, OUT_PAD), jnp.float32),
        grid_spec=pltpu.PrefetchScalarGridSpec(
            num_scalar_prefetch=0,
            grid=grid,
            in_specs=[
                pl.BlockSpec((bm, IN_PAD), lambda i: (i, 0)),     # x tile (streamed)
                pl.BlockSpec((IN_PAD, H1), lambda i: (0, 0)),     # W1 (VMEM-resident)
                pl.BlockSpec((1, H1), lambda i: (0, 0)),          # b1
                pl.BlockSpec((H1, H2), lambda i: (0, 0)),         # W2
                pl.BlockSpec((1, H2), lambda i: (0, 0)),          # b2
                pl.BlockSpec((H2, OUT_PAD), lambda i: (0, 0)),    # W3 (cols padded to 128)
                pl.BlockSpec((1, OUT_PAD), lambda i: (0, 0)),     # b3 (padded)
            ],
            out_specs=pl.BlockSpec((bm, OUT_PAD), lambda i: (i, 0)),
        ),
        compiler_params=pltpu.CompilerParams(
            dimension_semantics=("parallel",)),                   # megacore-shardable
    )(x_p, w1_p, b1r, w2_p, b2r, w3_p, b3r)

    return out[:B, :OUT_DIM]


def init_params(key):
    """nn.Linear default init: U(-1/sqrt(fan_in), +1/sqrt(fan_in)).

    Weights are stored as (in_features, out_features) (= PyTorch weight.T)."""
    def linear(key, fan_in, fan_out):
        kw, kb = jax.random.split(key)
        bound = 1.0 / jnp.sqrt(fan_in)
        w = jax.random.uniform(kw, (fan_in, fan_out), jnp.float32, -bound, bound)
        b = jax.random.uniform(kb, (fan_out,), jnp.float32, -bound, bound)
        return w, b

    k1, k2, k3 = jax.random.split(key, 3)
    w1, b1 = linear(k1, IN_DIM, H1)
    w2, b2 = linear(k2, H1, H2)
    w3, b3 = linear(k3, H2, OUT_DIM)
    return w1, b1, w2, b2, w3, b3


def reference_forward_f32(x, w1, b1, w2, b2, w3, b3):
    x = x.reshape(-1, IN_DIM).astype(jnp.float32)
    h1 = jnp.maximum(x @ w1 + b1, 0.0)
    h2 = jnp.maximum(h1 @ w2 + b2, 0.0)
    return h2 @ w3 + b3


def reference_forward_bf16(x, w1, b1, w2, b2, w3, b3):
    """Mirrors the kernel's bf16-operand / f32-accumulate arithmetic."""
    x = x.reshape(-1, IN_DIM).astype(jnp.bfloat16)
    h1 = jnp.maximum(jnp.dot(x, w1.astype(jnp.bfloat16),
                             preferred_element_type=jnp.float32) + b1, 0.0)
    h2 = jnp.maximum(jnp.dot(h1.astype(jnp.bfloat16), w2.astype(jnp.bfloat16),
                             preferred_element_type=jnp.float32) + b2, 0.0)
    return jnp.dot(h2.astype(jnp.bfloat16), w3.astype(jnp.bfloat16),
                   preferred_element_type=jnp.float32) + b3


if __name__ == "__main__":
    key = jax.random.PRNGKey(0)
    kx1, kx2, kp = jax.random.split(key, 3)
    params = init_params(kp)

    # Small MNIST-like batch (NCHW like PyTorch).
    x_small = jax.random.normal(kx1, (2, 1, 28, 28), dtype=jnp.float32)
    # A batch that exercises the 512-row-tile path (multi-tile grid + row padding).
    x_big = jax.random.normal(kx2, (1040, 1, 28, 28), dtype=jnp.float32)

    for x in (x_small, x_big):
        logits = jax.block_until_ready(mlp_forward(x, *params))
        assert logits.shape == (x.shape[0], OUT_DIM), logits.shape
        ref16 = reference_forward_bf16(x, *params)
        ref32 = reference_forward_f32(x, *params)
        err16 = float(jnp.max(jnp.abs(logits - ref16)))
        err32 = float(jnp.max(jnp.abs(logits - ref32)))
        assert err16 < 2e-2, err16   # vs. identical bf16/f32-accum arithmetic
        assert err32 < 1e-1, err32   # vs. pure-f32 reference (bf16 stream noise)

    print("KERNEL_OK")
</pallas_src>

<mosaic_0001>
module attributes {stable_mosaic.version = 11 : i64} {
  func.func @mlp_kernel(%arg0: i32, %arg1: memref<8x896xbf16, #tpu.memory_space<vmem>>, %arg2: memref<896x128xbf16, #tpu.memory_space<vmem>>, %arg3: memref<1x128xf32, #tpu.memory_space<vmem>>, %arg4: memref<128x64xbf16, #tpu.memory_space<vmem>>, %arg5: memref<1x64xf32, #tpu.memory_space<vmem>>, %arg6: memref<64x128xbf16, #tpu.memory_space<vmem>>, %arg7: memref<1x128xf32, #tpu.memory_space<vmem>>, %arg8: memref<8x128xf32, #tpu.memory_space<vmem>>) attributes {dimension_semantics = [#tpu.dimension_semantics<parallel>], iteration_bounds = array<i64: 1>, scalar_prefetch = 0 : i64, scratch_operands = 0 : i64, tpu.core_type = #tpu.core_type<tc>, window_params = [{transform_indices = @transform_0, window_bounds = array<i64: 8, 896>}, {pipeline_mode = #tpu.pipeline_mode<synchronous>, transform_indices = @transform_1, window_bounds = array<i64: 896, 128>}, {pipeline_mode = #tpu.pipeline_mode<synchronous>, transform_indices = @transform_2, window_bounds = array<i64: 1, 128>}, {pipeline_mode = #tpu.pipeline_mode<synchronous>, transform_indices = @transform_3, window_bounds = array<i64: 128, 64>}, {pipeline_mode = #tpu.pipeline_mode<synchronous>, transform_indices = @transform_4, window_bounds = array<i64: 1, 64>}, {pipeline_mode = #tpu.pipeline_mode<synchronous>, transform_indices = @transform_5, window_bounds = array<i64: 64, 128>}, {pipeline_mode = #tpu.pipeline_mode<synchronous>, transform_indices = @transform_6, window_bounds = array<i64: 1, 128>}, {transform_indices = @transform_7, window_bounds = array<i64: 8, 128>}]} {
    %c0 = arith.constant 0 : index
    %c0_0 = arith.constant 0 : index
    %0 = vector.load %arg1[%c0, %c0_0] : memref<8x896xbf16, #tpu.memory_space<vmem>>, vector<8x896xbf16>
    %c0_1 = arith.constant 0 : index
    %c0_2 = arith.constant 0 : index
    %1 = vector.load %arg2[%c0_1, %c0_2] : memref<896x128xbf16, #tpu.memory_space<vmem>>, vector<896x128xbf16>
    %cst = arith.constant dense<0.000000e+00> : vector<8x128xf32>
    %2 = tpu.matmul %0, %1, %cst {dimension_numbers = #tpu.dot_dimension_numbers<[1], [0], [0], [1], [0, 0, 1, 1], [], []>} : vector<8x896xbf16>, vector<896x128xbf16>, vector<8x128xf32> -> vector<8x128xf32>
    %c0_3 = arith.constant 0 : index
    %c0_4 = arith.constant 0 : index
    %3 = vector.load %arg3[%c0_3, %c0_4] : memref<1x128xf32, #tpu.memory_space<vmem>>, vector<1x128xf32>
    %4 = vector.broadcast %3 : vector<1x128xf32> to vector<8x128xf32>
    %5 = arith.addf %2, %4 : vector<8x128xf32>
    %cst_5 = arith.constant 0.000000e+00 : f32
    %6 = vector.broadcast %cst_5 : f32 to vector<8x128xf32>
    %7 = arith.maximumf %5, %6 : vector<8x128xf32>
    %8 = arith.truncf %7 : vector<8x128xf32> to vector<8x128xbf16>
    %c0_6 = arith.constant 0 : index
    %c0_7 = arith.constant 0 : index
    %9 = vector.load %arg4[%c0_6, %c0_7] : memref<128x64xbf16, #tpu.memory_space<vmem>>, vector<128x64xbf16>
    %cst_8 = arith.constant dense<0.000000e+00> : vector<8x64xf32>
    %10 = tpu.matmul %8, %9, %cst_8 {dimension_numbers = #tpu.dot_dimension_numbers<[1], [0], [0], [1], [0, 0, 1, 1], [], []>} : vector<8x128xbf16>, vector<128x64xbf16>, vector<8x64xf32> -> vector<8x64xf32>
    %c0_9 = arith.constant 0 : index
    %c0_10 = arith.constant 0 : index
    %11 = vector.load %arg5[%c0_9, %c0_10] : memref<1x64xf32, #tpu.memory_space<vmem>>, vector<1x64xf32>
    %12 = vector.broadcast %11 : vector<1x64xf32> to vector<8x64xf32>
    %13 = arith.addf %10, %12 : vector<8x64xf32>
    %cst_11 = arith.constant 0.000000e+00 : f32
    %14 = vector.broadcast %cst_11 : f32 to vector<8x64xf32>
    %15 = arith.maximumf %13, %14 : vector<8x64xf32>
    %16 = arith.truncf %15 : vector<8x64xf32> to vector<8x64xbf16>
    %c0_12 = arith.constant 0 : index
    %c0_13 = arith.constant 0 : index
    %17 = vector.load %arg6[%c0_12, %c0_13] : memref<64x128xbf16, #tpu.memory_space<vmem>>, vector<64x128xbf16>
    %cst_14 = arith.constant dense<0.000000e+00> : vector<8x128xf32>
    %18 = tpu.matmul %16, %17, %cst_14 {dimension_numbers = #tpu.dot_dimension_numbers<[1], [0], [0], [1], [0, 0, 1, 1], [], []>} : vector<8x64xbf16>, vector<64x128xbf16>, vector<8x128xf32> -> vector<8x128xf32>
    %c0_15 = arith.constant 0 : index
    %c0_16 = arith.constant 0 : index
    %19 = vector.load %arg7[%c0_15, %c0_16] : memref<1x128xf32, #tpu.memory_space<vmem>>, vector<1x128xf32>
    %20 = vector.broadcast %19 : vector<1x128xf32> to vector<8x128xf32>
    %21 = arith.addf %18, %20 : vector<8x128xf32>
    %c0_17 = arith.constant 0 : index
    %c0_18 = arith.constant 0 : index
    %22 = vector.load %arg8[%c0_17, %c0_18] : memref<8x128xf32, #tpu.memory_space<vmem>>, vector<8x128xf32>
    tpu.vector_store %arg8[%c0_17, %c0_18], %21 {strides = array<i32>} : memref<8x128xf32, #tpu.memory_space<vmem>>, vector<8x128xf32>,
    return
  }
  func.func @transform_0(%arg0: i32) -> (i32, i32) {
    %c0_i32 = arith.constant 0 : i32
    %c0_i32_0 = arith.constant 0 : i32
    return %arg0, %c0_i32 : i32, i32
  }
  func.func @transform_1(%arg0: i32) -> (i32, i32) {
    %c0_i32 = arith.constant 0 : i32
    %c0_i32_0 = arith.constant 0 : i32
    %c0_i32_1 = arith.constant 0 : i32
    return %c0_i32, %c0_i32_0 : i32, i32
  }
  func.func @transform_2(%arg0: i32) -> (i32, i32) {
    %c0_i32 = arith.constant 0 : i32
    %c0_i32_0 = arith.constant 0 : i32
    %c0_i32_1 = arith.constant 0 : i32
    return %c0_i32, %c0_i32_0 : i32, i32
  }
  func.func @transform_3(%arg0: i32) -> (i32, i32) {
    %c0_i32 = arith.constant 0 : i32
    %c0_i32_0 = arith.constant 0 : i32
    %c0_i32_1 = arith.constant 0 : i32
    return %c0_i32, %c0_i32_0 : i32, i32
  }
  func.func @transform_4(%arg0: i32) -> (i32, i32) {
    %c0_i32 = arith.constant 0 : i32
    %c0_i32_0 = arith.constant 0 : i32
    %c0_i32_1 = arith.constant 0 : i32
    return %c0_i32, %c0_i32_0 : i32, i32
  }
  func.func @transform_5(%arg0: i32) -> (i32, i32) {
    %c0_i32 = arith.constant 0 : i32
    %c0_i32_0 = arith.constant 0 : i32
    %c0_i32_1 = arith.constant 0 : i32
    return %c0_i32, %c0_i32_0 : i32, i32
  }
  func.func @transform_6(%arg0: i32) -> (i32, i32) {
    %c0_i32 = arith.constant 0 : i32
    %c0_i32_0 = arith.constant 0 : i32
    %c0_i32_1 = arith.constant 0 : i32
    return %c0_i32, %c0_i32_0 : i32, i32
  }
  func.func @transform_7(%arg0: i32) -> (i32, i32) {
    %c0_i32 = arith.constant 0 : i32
    %c0_i32_0 = arith.constant 0 : i32
    return %arg0, %c0_i32 : i32, i32
  }
}

</mosaic_0001>

<llo_original>
// kernel: mlp_forward.1
$region0: #{mlp_forward.1}
  #allocation0 [shape = 'u32[]', space=smem, size = 0x4, offset = 0x4, fixed_abs, tag = 'smem constant byte address 0x4 - core index']
  #allocation1 [shape = 'u32[144,128]{1,0:T(1,128)}', space=vmem, size = 0x12000, scoped, tag = 'internal scratch']
  %s0 = inlined_call_operand.vmem [shape: bf16[8,896], index: 0, kind: input, shape index: {}]
  %s1 = inlined_call_operand.vmem [shape: bf16[896,128], index: 1, kind: input, shape index: {}]
  %s2 = inlined_call_operand.vmem [shape: f32[1,128], index: 2, kind: input, shape index: {}]
  %s3 = inlined_call_operand.vmem [shape: bf16[128,64], index: 3, kind: input, shape index: {}]
  %s4 = inlined_call_operand.vmem [shape: f32[1,64], index: 4, kind: input, shape index: {}]
  %s5 = inlined_call_operand.vmem [shape: bf16[64,128], index: 5, kind: input, shape index: {}]
  %s6 = inlined_call_operand.vmem [shape: f32[1,128], index: 6, kind: input, shape index: {}]
  %s7 = inlined_call_operand.vmem [shape: f32[8,128], index: 7, kind: output, shape index: {}]
  %s8 = sld [smem:[#allocation0]]
  $region38: #{mlp_forward.1} parent=0
    _
  %s10 = ssub.s32 1, %s8
  %s11 = scalar_select 0, %s10, %s8
  // Predicated region
  $region2: #{mlp_forward.1} parent=0 // pred_check
    _
  $region3: #{mlp_forward.1} parent=0 // pred_check_branch
    %13 = sbr.rel (0) target = $region5
  $region4: #{mlp_forward.1} parent=0 // pred_region
    _
  $region5: #{mlp_forward.1} parent=0 // pred_fallthru
    _
  // Predicated region
  $region6: #{mlp_forward.1} parent=0 // pred_check
    _
  $region7: #{mlp_forward.1} parent=0 // pred_check_branch
    %15 = sbr.rel (0) target = $region9
  $region8: #{mlp_forward.1} parent=0 // pred_region
    _
  $region9: #{mlp_forward.1} parent=0 // pred_fallthru
    _
  // Predicated region
  $region10: #{mlp_forward.1} parent=0 // pred_check
    _
  $region11: #{mlp_forward.1} parent=0 // pred_check_branch
    %17 = sbr.rel (0) target = $region13
  $region12: #{mlp_forward.1} parent=0 // pred_region
    _
  $region13: #{mlp_forward.1} parent=0 // pred_fallthru
    _
  // Predicated region
  $region14: #{mlp_forward.1} parent=0 // pred_check
    _
  $region15: #{mlp_forward.1} parent=0 // pred_check_branch
    %19 = sbr.rel (0) target = $region17
  $region16: #{mlp_forward.1} parent=0 // pred_region
    _
  $region17: #{mlp_forward.1} parent=0 // pred_fallthru
    _
  // Predicated region
  $region18: #{mlp_forward.1} parent=0 // pred_check
    _
  $region19: #{mlp_forward.1} parent=0 // pred_check_branch
    %21 = sbr.rel (0) target = $region21
  $region20: #{mlp_forward.1} parent=0 // pred_region
    _
  $region21: #{mlp_forward.1} parent=0 // pred_fallthru
    _
  // Predicated region
  $region22: #{mlp_forward.1} parent=0 // pred_check
    _
  $region23: #{mlp_forward.1} parent=0 // pred_check_branch
    %23 = sbr.rel (0) target = $region25
  $region24: #{mlp_forward.1} parent=0 // pred_region
    _
  $region25: #{mlp_forward.1} parent=0 // pred_fallthru
    _
  // Predicated region
  $region26: #{mlp_forward.1} parent=0 // pred_check
    _
  $region27: #{mlp_forward.1} parent=0 // pred_check_branch
    %25 = sbr.rel (0) target = $region29
  $region28: #{mlp_forward.1} parent=0 // pred_region
    _
  $region29: #{mlp_forward.1} parent=0 // pred_fallthru
    _
  %v27 = vld [vmem:[%s0] sm:$0xff]
  %v28 = vld [vmem:[%s0 + $0x8] sm:$0xff]
  %v29 = vld [vmem:[%s0 + $0x10] sm:$0xff]
  %v30 = vld [vmem:[%s0 + $0x18] sm:$0xf]
  %v31 = vld [vmem:[%s1] sm:$0xf]
  %v32 = vld [vmem:[%s1 + $0x4] sm:$0xf]
  %v33 = vld [vmem:[%s1 + $0x8] sm:$0xf]
  %v34 = vld [vmem:[%s1 + $0xc] sm:$0xf]
  %v35 = vld [vmem:[%s1 + $0x10] sm:$0xf]
  %v36 = vld [vmem:[%s1 + $0x14] sm:$0xf]
  %v37 = vld [vmem:[%s1 + $0x18] sm:$0xf]
  %v38 = vld [vmem:[%s1 + $0x1c] sm:$0xf]
  %v39 = vld [vmem:[%s1 + $0x20] sm:$0xf]
  %v40 = vld [vmem:[%s1 + $0x24] sm:$0xf]
  %v41 = vld [vmem:[%s1 + $0x28] sm:$0xf]
  %v42 = vld [vmem:[%s1 + $0x2c] sm:$0xf]
  %v43 = vld [vmem:[%s1 + $0x30] sm:$0xf]
  %v44 = vld [vmem:[%s1 + $0x34] sm:$0xf]
  %v45 = vld [vmem:[%s1 + $0x38] sm:$0xf]
  %v46 = vld [vmem:[%s1 + $0x3c] sm:$0xf]
  %v47 = vld [vmem:[%s1 + $0x40] sm:$0xf]
  %v48 = vld [vmem:[%s1 + $0x44] sm:$0xf]
  %v49 = vld [vmem:[%s1 + $0x48] sm:$0xf]
  %v50 = vld [vmem:[%s1 + $0x4c] sm:$0xf]
  %v51 = vld [vmem:[%s1 + $0x50] sm:$0xf]
  %v52 = vld [vmem:[%s1 + $0x54] sm:$0xf]
  %v53 = vld [vmem:[%s1 + $0x58] sm:$0xf]
  %v54 = vld [vmem:[%s1 + $0x5c] sm:$0xf]
  %v55 = vld [vmem:[%s1 + $0x60] sm:$0xf]
  %v56 = vld [vmem:[%s1 + $0x64] sm:$0xf]
  %v57 = vld [vmem:[%s1 + $0x68] sm:$0xf]
  %v58 = vld [vmem:[%s1 + $0x6c] sm:$0xf]
  %v59 = vld [vmem:[%s1 + $0x70] sm:$0xf]
  %v60 = vld [vmem:[%s1 + $0x74] sm:$0xf]
  %v61 = vld [vmem:[%s1 + $0x78] sm:$0xf]
  %v62 = vld [vmem:[%s1 + $0x7c] sm:$0xf]
  %v63 = vld [vmem:[%s1 + $0x80] sm:$0xf]
  %v64 = vld [vmem:[%s1 + $0x84] sm:$0xf]
  %v65 = vld [vmem:[%s1 + $0x88] sm:$0xf]
  %v66 = vld [vmem:[%s1 + $0x8c] sm:$0xf]
  %v67 = vld [vmem:[%s1 + $0x90] sm:$0xf]
  %v68 = vld [vmem:[%s1 + $0x94] sm:$0xf]
  %v69 = vld [vmem:[%s1 + $0x98] sm:$0xf]
  %v70 = vld [vmem:[%s1 + $0x9c] sm:$0xf]
  %v71 = vld [vmem:[%s1 + $0xa0] sm:$0xf]
  %v72 = vld [vmem:[%s1 + $0xa4] sm:$0xf]
  %v73 = vld [vmem:[%s1 + $0xa8] sm:$0xf]
  %v74 = vld [vmem:[%s1 + $0xac] sm:$0xf]
  %v75 = vld [vmem:[%s1 + $0xb0] sm:$0xf]
  %v76 = vld [vmem:[%s1 + $0xb4] sm:$0xf]
  %v77 = vld [vmem:[%s1 + $0xb8] sm:$0xf]
  %v78 = vld [vmem:[%s1 + $0xbc] sm:$0xf]
  %v79 = vld [vmem:[%s1 + $0xc0] sm:$0xf]
  %v80 = vld [vmem:[%s1 + $0xc4] sm:$0xf]
  %v81 = vld [vmem:[%s1 + $0xc8] sm:$0xf]
  %v82 = vld [vmem:[%s1 + $0xcc] sm:$0xf]
  %v83 = vld [vmem:[%s1 + $0xd0] sm:$0xf]
  %v84 = vld [vmem:[%s1 + $0xd4] sm:$0xf]
  %v85 = vld [vmem:[%s1 + $0xd8] sm:$0xf]
  %v86 = vld [vmem:[%s1 + $0xdc] sm:$0xf]
  %v87 = vld [vmem:[%s1 + $0xe0] sm:$0xf]
  %v88 = vld [vmem:[%s1 + $0xe4] sm:$0xf]
  %v89 = vld [vmem:[%s1 + $0xe8] sm:$0xf]
  %v90 = vld [vmem:[%s1 + $0xec] sm:$0xf]
  %v91 = vld [vmem:[%s1 + $0xf0] sm:$0xf]
  %v92 = vld [vmem:[%s1 + $0xf4] sm:$0xf]
  %v93 = vld [vmem:[%s1 + $0xf8] sm:$0xf]
  %v94 = vld [vmem:[%s1 + $0xfc] sm:$0xf]
  %v95 = vld [vmem:[%s1 + $0x100] sm:$0xf]
  %v96 = vld [vmem:[%s1 + $0x104] sm:$0xf]
  %v97 = vld [vmem:[%s1 + $0x108] sm:$0xf]
  %v98 = vld [vmem:[%s1 + $0x10c] sm:$0xf]
  %v99 = vld [vmem:[%s1 + $0x110] sm:$0xf]
  %v100 = vld [vmem:[%s1 + $0x114] sm:$0xf]
  %v101 = vld [vmem:[%s1 + $0x118] sm:$0xf]
  %v102 = vld [vmem:[%s1 + $0x11c] sm:$0xf]
  %v103 = vld [vmem:[%s1 + $0x120] sm:$0xf]
  %v104 = vld [vmem:[%s1 + $0x124] sm:$0xf]
  %v105 = vld [vmem:[%s1 + $0x128] sm:$0xf]
  %v106 = vld [vmem:[%s1 + $0x12c] sm:$0xf]
  %v107 = vld [vmem:[%s1 + $0x130] sm:$0xf]
  %v108 = vld [vmem:[%s1 + $0x134] sm:$0xf]
  %v109 = vld [vmem:[%s1 + $0x138] sm:$0xf]
  %v110 = vld [vmem:[%s1 + $0x13c] sm:$0xf]
  %v111 = vld [vmem:[%s1 + $0x140] sm:$0xf]
  %v112 = vld [vmem:[%s1 + $0x144] sm:$0xf]
  %v113 = vld [vmem:[%s1 + $0x148] sm:$0xf]
  %v114 = vld [vmem:[%s1 + $0x14c] sm:$0xf]
  %v115 = vld [vmem:[%s1 + $0x150] sm:$0xf]
  %v116 = vld [vmem:[%s1 + $0x154] sm:$0xf]
  %v117 = vld [vmem:[%s1 + $0x158] sm:$0xf]
  %v118 = vld [vmem:[%s1 + $0x15c] sm:$0xf]
  %v119 = vld [vmem:[%s1 + $0x160] sm:$0xf]
  %v120 = vld [vmem:[%s1 + $0x164] sm:$0xf]
  %v121 = vld [vmem:[%s1 + $0x168] sm:$0xf]
  %v122 = vld [vmem:[%s1 + $0x16c] sm:$0xf]
  %v123 = vld [vmem:[%s1 + $0x170] sm:$0xf]
  %v124 = vld [vmem:[%s1 + $0x174] sm:$0xf]
  %v125 = vld [vmem:[%s1 + $0x178] sm:$0xf]
  %v126 = vld [vmem:[%s1 + $0x17c] sm:$0xf]
  %v127 = vld [vmem:[%s1 + $0x180] sm:$0xf]
  %v128 = vld [vmem:[%s1 + $0x184] sm:$0xf]
  %v129 = vld [vmem:[%s1 + $0x188] sm:$0xf]
  %v130 = vld [vmem:[%s1 + $0x18c] sm:$0xf]
  %v131 = vld [vmem:[%s1 + $0x190] sm:$0xf]
  %v132 = vld [vmem:[%s1 + $0x194] sm:$0xf]
  %v133 = vld [vmem:[%s1 + $0x198] sm:$0xf]
  %v134 = vld [vmem:[%s1 + $0x19c] sm:$0xf]
  %v135 = vld [vmem:[%s1 + $0x1a0] sm:$0xf]
  %v136 = vld [vmem:[%s1 + $0x1a4] sm:$0xf]
  %v137 = vld [vmem:[%s1 + $0x1a8] sm:$0xf]
  %v138 = vld [vmem:[%s1 + $0x1ac] sm:$0xf]
  %v139 = vld [vmem:[%s1 + $0x1b0] sm:$0xf]
  %v140 = vld [vmem:[%s1 + $0x1b4] sm:$0xf]
  %v141 = vld [vmem:[%s1 + $0x1b8] sm:$0xf]
  %v142 = vld [vmem:[%s1 + $0x1bc] sm:$0xf]
  %v143 = vld [vmem:[%s2] sm:$0x1]
  %v145 = vlaneseq
  %v146 = vshrl.u32 %v145, 7
  %v147 = vsub.s32 0, %v146
  %v148 = vrot.slane %v143, %v147
  %v154 = vunpack.c.l.b16 %v27
  %v155 = vunpack.c.h.b16 %v27
  %v156 = vunpack.c.l.b16 %v28
  %v157 = vunpack.c.h.b16 %v28
  %v158 = vunpack.c.l.b16 %v29
  %v159 = vunpack.c.h.b16 %v29
  %v160 = vunpack.c.l.b16 %v30
  %v161 = vpack.c.b16 %v154, %v154
  %v162 = vpack.c.b16 %v155, %v155
  %v163 = vpack.c.b16 %v156, %v156
  %v164 = vpack.c.b16 %v157, %v157
  %v165 = vpack.c.b16 %v158, %v158
  %v166 = vpack.c.b16 %v159, %v159
  %v167 = vpack.c.b16 %v160, %v160
  %v287 = vunpack.c.l.b16 %v31
  %v288 = vunpack.c.l.b16 %v32
  %v289 = vunpack.c.l.b16 %v33
  %v290 = vunpack.c.l.b16 %v34
  %v291 = vunpack.c.l.b16 %v35
  %v292 = vunpack.c.l.b16 %v36
  %v293 = vunpack.c.l.b16 %v37
  %v294 = vunpack.c.l.b16 %v38
  %v295 = vunpack.c.l.b16 %v39
  %v296 = vunpack.c.l.b16 %v40
  %v297 = vunpack.c.l.b16 %v41
  %v298 = vunpack.c.l.b16 %v42
  %v299 = vunpack.c.l.b16 %v43
  %v300 = vunpack.c.l.b16 %v44
  %v301 = vunpack.c.l.b16 %v45
  %v302 = vunpack.c.l.b16 %v46
  %v303 = vunpack.c.l.b16 %v47
  %v304 = vunpack.c.l.b16 %v48
  %v305 = vunpack.c.l.b16 %v49
  %v306 = vunpack.c.l.b16 %v50
  %v307 = vunpack.c.l.b16 %v51
  %v308 = vunpack.c.l.b16 %v52
  %v309 = vunpack.c.l.b16 %v53
  %v310 = vunpack.c.l.b16 %v54
  %v311 = vunpack.c.l.b16 %v55
  %v312 = vunpack.c.l.b16 %v56
  %v313 = vunpack.c.l.b16 %v57
  %v314 = vunpack.c.l.b16 %v58
  %v315 = vunpack.c.l.b16 %v59
  %v316 = vunpack.c.l.b16 %v60
  %v317 = vunpack.c.l.b16 %v61
  %v318 = vunpack.c.l.b16 %v62
  %v319 = vunpack.c.l.b16 %v63
  %v320 = vunpack.c.l.b16 %v64
  %v321 = vunpack.c.l.b16 %v65
  %v322 = vunpack.c.l.b16 %v66
  %v323 = vunpack.c.l.b16 %v67
  %v324 = vunpack.c.l.b16 %v68
  %v325 = vunpack.c.l.b16 %v69
  %v326 = vunpack.c.l.b16 %v70
  %v327 = vunpack.c.l.b16 %v71
  %v328 = vunpack.c.l.b16 %v72
  %v329 = vunpack.c.l.b16 %v73
  %v330 = vunpack.c.l.b16 %v74
  %v331 = vunpack.c.l.b16 %v75
  %v332 = vunpack.c.l.b16 %v76
  %v333 = vunpack.c.l.b16 %v77
  %v334 = vunpack.c.l.b16 %v78
  %v335 = vunpack.c.l.b16 %v79
  %v336 = vunpack.c.l.b16 %v80
  %v337 = vunpack.c.l.b16 %v81
  %v338 = vunpack.c.l.b16 %v82
  %v339 = vunpack.c.l.b16 %v83
  %v340 = vunpack.c.l.b16 %v84
  %v341 = vunpack.c.l.b16 %v85
  %v342 = vunpack.c.l.b16 %v86
  %v343 = vunpack.c.l.b16 %v87
  %v344 = vunpack.c.l.b16 %v88
  %v345 = vunpack.c.l.b16 %v89
  %v346 = vunpack.c.l.b16 %v90
  %v347 = vunpack.c.l.b16 %v91
  %v348 = vunpack.c.l.b16 %v92
  %v349 = vunpack.c.l.b16 %v93
  %v350 = vunpack.c.l.b16 %v94
  %v351 = vunpack.c.l.b16 %v95
  %v352 = vunpack.c.l.b16 %v96
  %v353 = vunpack.c.l.b16 %v97
  %v354 = vunpack.c.l.b16 %v98
  %v355 = vunpack.c.l.b16 %v99
  %v356 = vunpack.c.l.b16 %v100
  %v357 = vunpack.c.l.b16 %v101
  %v358 = vunpack.c.l.b16 %v102
  %v359 = vunpack.c.l.b16 %v103
  %v360 = vunpack.c.l.b16 %v104
  %v361 = vunpack.c.l.b16 %v105
  %v362 = vunpack.c.l.b16 %v106
  %v363 = vunpack.c.l.b16 %v107
  %v364 = vunpack.c.l.b16 %v108
  %v365 = vunpack.c.l.b16 %v109
  %v366 = vunpack.c.l.b16 %v110
  %v367 = vunpack.c.l.b16 %v111
  %v368 = vunpack.c.l.b16 %v112
  %v369 = vunpack.c.l.b16 %v113
  %v370 = vunpack.c.l.b16 %v114
  %v371 = vunpack.c.l.b16 %v115
  %v372 = vunpack.c.l.b16 %v116
  %v373 = vunpack.c.l.b16 %v117
  %v374 = vunpack.c.l.b16 %v118
  %v375 = vunpack.c.l.b16 %v119
  %v376 = vunpack.c.l.b16 %v120
  %v377 = vunpack.c.l.b16 %v121
  %v378 = vunpack.c.l.b16 %v122
  %v379 = vunpack.c.l.b16 %v123
  %v380 = vunpack.c.l.b16 %v124
  %v381 = vunpack.c.l.b16 %v125
  %v382 = vunpack.c.l.b16 %v126
  %v383 = vunpack.c.l.b16 %v127
  %v384 = vunpack.c.l.b16 %v128
  %v385 = vunpack.c.l.b16 %v129
  %v386 = vunpack.c.l.b16 %v130
  %v387 = vunpack.c.l.b16 %v131
  %v388 = vunpack.c.l.b16 %v132
  %v389 = vunpack.c.l.b16 %v133
  %v390 = vunpack.c.l.b16 %v134
  %v391 = vunpack.c.l.b16 %v135
  %v392 = vunpack.c.l.b16 %v136
  %v393 = vunpack.c.l.b16 %v137
  %v394 = vunpack.c.l.b16 %v138
  %v395 = vunpack.c.l.b16 %v139
  %v396 = vunpack.c.l.b16 %v140
  %v397 = vunpack.c.l.b16 %v141
  %v398 = vunpack.c.l.b16 %v142
  %v399 = vpack.c.b16 %v288, %v287
  %v400 = vpack.c.b16 %v290, %v289
  %v401 = vpack.c.b16 %v292, %v291
  %v402 = vpack.c.b16 %v294, %v293
  %v403 = vpack.c.b16 %v296, %v295
  %v404 = vpack.c.b16 %v298, %v297
  %v405 = vpack.c.b16 %v300, %v299
  %v406 = vpack.c.b16 %v302, %v301
  %v407 = vpack.c.b16 %v304, %v303
  %v408 = vpack.c.b16 %v306, %v305
  %v409 = vpack.c.b16 %v308, %v307
  %v410 = vpack.c.b16 %v310, %v309
  %v411 = vpack.c.b16 %v312, %v311
  %v412 = vpack.c.b16 %v314, %v313
  %v413 = vpack.c.b16 %v316, %v315
  %v414 = vpack.c.b16 %v318, %v317
  %v415 = vpack.c.b16 %v320, %v319
  %v416 = vpack.c.b16 %v322, %v321
  %v417 = vpack.c.b16 %v324, %v323
  %v418 = vpack.c.b16 %v326, %v325
  %v419 = vpack.c.b16 %v328, %v327
  %v420 = vpack.c.b16 %v330, %v329
  %v421 = vpack.c.b16 %v332, %v331
  %v422 = vpack.c.b16 %v334, %v333
  %v423 = vpack.c.b16 %v336, %v335
  %v424 = vpack.c.b16 %v338, %v337
  %v425 = vpack.c.b16 %v340, %v339
  %v426 = vpack.c.b16 %v342, %v341
  %v427 = vpack.c.b16 %v344, %v343
  %v428 = vpack.c.b16 %v346, %v345
  %v429 = vpack.c.b16 %v348, %v347
  %v430 = vpack.c.b16 %v350, %v349
  %v431 = vpack.c.b16 %v352, %v351
  %v432 = vpack.c.b16 %v354, %v353
  %v433 = vpack.c.b16 %v356, %v355
  %v434 = vpack.c.b16 %v358, %v357
  %v435 = vpack.c.b16 %v360, %v359
  %v436 = vpack.c.b16 %v362, %v361
  %v437 = vpack.c.b16 %v364, %v363
  %v438 = vpack.c.b16 %v366, %v365
  %v439 = vpack.c.b16 %v368, %v367
  %v440 = vpack.c.b16 %v370, %v369
  %v441 = vpack.c.b16 %v372, %v371
  %v442 = vpack.c.b16 %v374, %v373
  %v443 = vpack.c.b16 %v376, %v375
  %v444 = vpack.c.b16 %v378, %v377
  %v445 = vpack.c.b16 %v380, %v379
  %v446 = vpack.c.b16 %v382, %v381
  %v447 = vpack.c.b16 %v384, %v383
  %v448 = vpack.c.b16 %v386, %v385
  %v449 = vpack.c.b16 %v388, %v387
  %v450 = vpack.c.b16 %v390, %v389
  %v451 = vpack.c.b16 %v392, %v391
  %v452 = vpack.c.b16 %v394, %v393
  %v453 = vpack.c.b16 %v396, %v395
  %v454 = vpack.c.b16 %v398, %v397
  %511 = vmatprep.subr.bf16.mxu0 0
  %512 = vmatpush1.bf16.msra.mxu0 %v406
  %513 = vmatprep.subr.bf16.mxu0 0
  %514 = vmatpush1.bf16.msra.mxu0 %v405
  %515 = vmatprep.subr.bf16.mxu0 0
  %516 = vmatpush1.bf16.msra.mxu0 %v404
  %517 = vmatprep.subr.bf16.mxu0 0
  %518 = vmatpush1.bf16.msra.mxu0 %v403
  %519 = vmatprep.subr.bf16.mxu0 0
  %520 = vmatpush1.bf16.msra.mxu0 %v402
  %521 = vmatprep.subr.bf16.mxu0 0
  %522 = vmatpush1.bf16.msra.mxu0 %v401
  %523 = vmatprep.subr.bf16.mxu0 0
  %524 = vmatpush1.bf16.msra.mxu0 %v400
  %525 = vmatprep.subr.bf16.mxu0 0
  %526 = vmatpush1.bf16.msra.mxu0 %v399
  %527 = vmatprep.subr.bf16.mxu0 0
  %528 = vmatpush2.bf16.msra.mxu0 %v414
  %529 = vmatprep.subr.bf16.mxu0 0
  %530 = vmatpush2.bf16.msra.mxu0 %v413
  %531 = vmatprep.subr.bf16.mxu0 0
  %532 = vmatpush2.bf16.msra.mxu0 %v412
  %533 = vmatprep.subr.bf16.mxu0 0
  %534 = vmatpush2.bf16.msra.mxu0 %v411
  %535 = vmatprep.subr.bf16.mxu0 0
  %536 = vmatpush2.bf16.msra.mxu0 %v410
  %537 = vmatprep.subr.bf16.mxu0 0
  %538 = vmatpush2.bf16.msra.mxu0 %v409
  %539 = vmatprep.subr.bf16.mxu0 0
  %540 = vmatpush2.bf16.msra.mxu0 %v408
  %541 = vmatprep.subr.bf16.mxu0 0
  %542 = vmatpush2.bf16.msra.mxu0 %v407
  %543 = vmatprep.mubr.bf16.mxu0 %v162
  %544 = vmatmul.mubr.bf16.gmra.mxu0 %v161
  %v545 = vpop.f32.mrf.mxu0
  %v546 = vadd.f32 %v148, %v545
  %v547 = vpop.f32.mrf.mxu0
  %v548 = vpop.f32.mrf.mxu0
  %v549 = vpop.f32.mrf.mxu0
  %550 = vdwg.mxu0
  %551 = vmatprep.subr.bf16.mxu0 0
  %552 = vmatpush1.bf16.msra.mxu0 %v422
  %553 = vmatprep.subr.bf16.mxu0 0
  %554 = vmatpush1.bf16.msra.mxu0 %v421
  %555 = vmatprep.subr.bf16.mxu0 0
  %556 = vmatpush1.bf16.msra.mxu0 %v420
  %557 = vmatprep.subr.bf16.mxu0 0
  %558 = vmatpush1.bf16.msra.mxu0 %v419
  %559 = vmatprep.subr.bf16.mxu0 0
  %560 = vmatpush1.bf16.msra.mxu0 %v418
  %561 = vmatprep.subr.bf16.mxu0 0
  %562 = vmatpush1.bf16.msra.mxu0 %v417
  %563 = vmatprep.subr.bf16.mxu0 0
  %564 = vmatpush1.bf16.msra.mxu0 %v416
  %565 = vmatprep.subr.bf16.mxu0 0
  %566 = vmatpush1.bf16.msra.mxu0 %v415
  %567 = vmatprep.subr.bf16.mxu0 0
  %568 = vmatpush2.bf16.msra.mxu0 %v430
  %569 = vmatprep.subr.bf16.mxu0 0
  %570 = vmatpush2.bf16.msra.mxu0 %v429
  %571 = vmatprep.subr.bf16.mxu0 0
  %572 = vmatpush2.bf16.msra.mxu0 %v428
  %573 = vmatprep.subr.bf16.mxu0 0
  %574 = vmatpush2.bf16.msra.mxu0 %v427
  %575 = vmatprep.subr.bf16.mxu0 0
  %576 = vmatpush2.bf16.msra.mxu0 %v426
  %577 = vmatprep.subr.bf16.mxu0 0
  %578 = vmatpush2.bf16.msra.mxu0 %v425
  %579 = vmatprep.subr.bf16.mxu0 0
  %580 = vmatpush2.bf16.msra.mxu0 %v424
  %581 = vmatprep.subr.bf16.mxu0 0
  %582 = vmatpush2.bf16.msra.mxu0 %v423
  %583 = vmatprep.mubr.bf16.mxu0 %v164
  %584 = vmatmul.mubr.bf16.gmra.mxu0 %v163
  %v585 = vpop.f32.mrf.mxu0
  %v586 = vadd.f32 %v546, %v585
  %v587 = vpop.f32.mrf.mxu0
  %v588 = vpop.f32.mrf.mxu0
  %v589 = vpop.f32.mrf.mxu0
  %590 = vdwg.mxu0
  %591 = vmatprep.subr.bf16.mxu0 0
  %592 = vmatpush1.bf16.msra.mxu0 %v438
  %593 = vmatprep.subr.bf16.mxu0 0
  %594 = vmatpush1.bf16.msra.mxu0 %v437
  %595 = vmatprep.subr.bf16.mxu0 0
  %596 = vmatpush1.bf16.msra.mxu0 %v436
  %597 = vmatprep.subr.bf16.mxu0 0
  %598 = vmatpush1.bf16.msra.mxu0 %v435
  %599 = vmatprep.subr.bf16.mxu0 0
  %600 = vmatpush1.bf16.msra.mxu0 %v434
  %601 = vmatprep.subr.bf16.mxu0 0
  %602 = vmatpush1.bf16.msra.mxu0 %v433
  %603 = vmatprep.subr.bf16.mxu0 0
  %604 = vmatpush1.bf16.msra.mxu0 %v432
  %605 = vmatprep.subr.bf16.mxu0 0
  %606 = vmatpush1.bf16.msra.mxu0 %v431
  %607 = vmatprep.subr.bf16.mxu0 0
  %608 = vmatpush2.bf16.msra.mxu0 %v446
  %609 = vmatprep.subr.bf16.mxu0 0
  %610 = vmatpush2.bf16.msra.mxu0 %v445
  %611 = vmatprep.subr.bf16.mxu0 0
  %612 = vmatpush2.bf16.msra.mxu0 %v444
  %613 = vmatprep.subr.bf16.mxu0 0
  %614 = vmatpush2.bf16.msra.mxu0 %v443
  %615 = vmatprep.subr.bf16.mxu0 0
  %616 = vmatpush2.bf16.msra.mxu0 %v442
  %617 = vmatprep.subr.bf16.mxu0 0
  %618 = vmatpush2.bf16.msra.mxu0 %v441
  %619 = vmatprep.subr.bf16.mxu0 0
  %620 = vmatpush2.bf16.msra.mxu0 %v440
  %621 = vmatprep.subr.bf16.mxu0 0
  %622 = vmatpush2.bf16.msra.mxu0 %v439
  %623 = vmatprep.mubr.bf16.mxu0 %v166
  %624 = vmatmul.mubr.bf16.gmra.mxu0 %v165
  %v625 = vpop.f32.mrf.mxu0
  %v626 = vadd.f32 %v586, %v625
  %v627 = vpop.f32.mrf.mxu0
  %v628 = vpop.f32.mrf.mxu0
  %v629 = vpop.f32.mrf.mxu0
  %630 = vdwg.mxu0
  %631 = vmatprep.subr.bf16.mxu0 0
  %632 = vmatpush1.bf16.msra.mxu0 %v454
  %633 = vmatprep.subr.bf16.mxu0 0
  %634 = vmatpush1.bf16.msra.mxu0 %v453
  %635 = vmatprep.subr.bf16.mxu0 0
  %636 = vmatpush1.bf16.msra.mxu0 %v452
  %637 = vmatprep.subr.bf16.mxu0 0
  %638 = vmatpush1.bf16.msra.mxu0 %v451
  %639 = vmatprep.subr.bf16.mxu0 0
  %640 = vmatpush1.bf16.msra.mxu0 %v450
  %641 = vmatprep.subr.bf16.mxu0 0
  %642 = vmatpush1.bf16.msra.mxu0 %v449
  %643 = vmatprep.subr.bf16.mxu0 0
  %644 = vmatpush1.bf16.msra.mxu0 %v448
  %645 = vmatprep.subr.bf16.mxu0 0
  %646 = vmatpush1.bf16.msra.mxu0 %v447
  %647 = vmatprep.subr.bf16.mxu0 0
  %648 = vmatpush2.bf16.msra.mxu0 0
  %649 = vmatprep.subr.bf16.mxu0 0
  %650 = vmatpush2.bf16.msra.mxu0 0
  %651 = vmatprep.subr.bf16.mxu0 0
  %652 = vmatpush2.bf16.msra.mxu0 0
  %653 = vmatprep.subr.bf16.mxu0 0
  %654 = vmatpush2.bf16.msra.mxu0 0
  %655 = vmatprep.subr.bf16.mxu0 0
  %656 = vmatpush2.bf16.msra.mxu0 0
  %657 = vmatprep.subr.bf16.mxu0 0
  %658 = vmatpush2.bf16.msra.mxu0 0
  %659 = vmatprep.subr.bf16.mxu0 0
  %660 = vmatpush2.bf16.msra.mxu0 0
  %661 = vmatprep.subr.bf16.mxu0 0
  %662 = vmatpush2.bf16.msra.mxu0 0
  %663 = vmatprep.mubr.bf16.mxu0 0
  %664 = vmatmul.mubr.bf16.gmra.mxu0 %v167
  %v665 = vpop.f32.mrf.mxu0
  %v666 = vadd.f32 %v626, %v665
  %v667 = vpop.f32.mrf.mxu0
  %v668 = vpop.f32.mrf.mxu0
  %v669 = vpop.f32.mrf.mxu0
  %670 = vdwg.mxu0
  %v671 = vmax.f32 %v666, 0.0
  %v672 = vpack.c.bf16 %v671, %v671
  %v673 = vld [vmem:[%s3] sm:$0xf]
  %v674 = vld [vmem:[%s3 + $0x4] sm:$0xf]
  %v675 = vld [vmem:[%s3 + $0x8] sm:$0xf]
  %v676 = vld [vmem:[%s3 + $0xc] sm:$0xf]
  %v677 = vld [vmem:[%s3 + $0x10] sm:$0xf]
  %v678 = vld [vmem:[%s3 + $0x14] sm:$0xf]
  %v679 = vld [vmem:[%s3 + $0x18] sm:$0xf]
  %v680 = vld [vmem:[%s3 + $0x1c] sm:$0xf]
  %v681 = vld [vmem:[%s3 + $0x20] sm:$0xf]
  %v682 = vld [vmem:[%s3 + $0x24] sm:$0xf]
  %v683 = vld [vmem:[%s3 + $0x28] sm:$0xf]
  %v684 = vld [vmem:[%s3 + $0x2c] sm:$0xf]
  %v685 = vld [vmem:[%s3 + $0x30] sm:$0xf]
  %v686 = vld [vmem:[%s3 + $0x34] sm:$0xf]
  %v687 = vld [vmem:[%s3 + $0x38] sm:$0xf]
  %v688 = vld [vmem:[%s3 + $0x3c] sm:$0xf]
  %v689 = vld [vmem:[%s4] sm:$0x1]
  %v691 = vlaneseq
  %v692 = vshrl.u32 %v691, 7
  %v693 = vsub.s32 0, %v692
  %v694 = vrot.slane %v689, %v693
  %v712 = vunpack.c.l.b16 %v673
  %v713 = vunpack.c.l.b16 %v674
  %v714 = vunpack.c.l.b16 %v675
  %v715 = vunpack.c.l.b16 %v676
  %v716 = vunpack.c.l.b16 %v677
  %v717 = vunpack.c.l.b16 %v678
  %v718 = vunpack.c.l.b16 %v679
  %v719 = vunpack.c.l.b16 %v680
  %v720 = vunpack.c.l.b16 %v681
  %v721 = vunpack.c.l.b16 %v682
  %v722 = vunpack.c.l.b16 %v683
  %v723 = vunpack.c.l.b16 %v684
  %v724 = vunpack.c.l.b16 %v685
  %v725 = vunpack.c.l.b16 %v686
  %v726 = vunpack.c.l.b16 %v687
  %v727 = vunpack.c.l.b16 %v688
  %v728 = vpack.c.b16 %v713, %v712
  %v729 = vpack.c.b16 %v715, %v714
  %v730 = vpack.c.b16 %v717, %v716
  %v731 = vpack.c.b16 %v719, %v718
  %v732 = vpack.c.b16 %v721, %v720
  %v733 = vpack.c.b16 %v723, %v722
  %v734 = vpack.c.b16 %v725, %v724
  %v735 = vpack.c.b16 %v727, %v726
  %744 = vmatprep.subr.bf16.mxu0 0
  %745 = vmatpush1.bf16.msra.mxu0 %v735
  %746 = vmatprep.subr.bf16.mxu0 0
  %747 = vmatpush1.bf16.msra.mxu0 %v734
  %748 = vmatprep.subr.bf16.mxu0 0
  %749 = vmatpush1.bf16.msra.mxu0 %v733
  %750 = vmatprep.subr.bf16.mxu0 0
  %751 = vmatpush1.bf16.msra.mxu0 %v732
  %752 = vmatprep.subr.bf16.mxu0 0
  %753 = vmatpush1.bf16.msra.mxu0 %v731
  %754 = vmatprep.subr.bf16.mxu0 0
  %755 = vmatpush1.bf16.msra.mxu0 %v730
  %756 = vmatprep.subr.bf16.mxu0 0
  %757 = vmatpush1.bf16.msra.mxu0 %v729
  %758 = vmatprep.subr.bf16.mxu0 0
  %759 = vmatpush1.bf16.msra.mxu0 %v728
  %760 = vmatprep.subr.bf16.mxu0 0
  %761 = vmatpush2.bf16.msra.mxu0 0
  %762 = vmatprep.subr.bf16.mxu0 0
  %763 = vmatpush2.bf16.msra.mxu0 0
  %764 = vmatprep.subr.bf16.mxu0 0
  %765 = vmatpush2.bf16.msra.mxu0 0
  %766 = vmatprep.subr.bf16.mxu0 0
  %767 = vmatpush2.bf16.msra.mxu0 0
  %768 = vmatprep.subr.bf16.mxu0 0
  %769 = vmatpush2.bf16.msra.mxu0 0
  %770 = vmatprep.subr.bf16.mxu0 0
  %771 = vmatpush2.bf16.msra.mxu0 0
  %772 = vmatprep.subr.bf16.mxu0 0
  %773 = vmatpush2.bf16.msra.mxu0 0
  %774 = vmatprep.subr.bf16.mxu0 0
  %775 = vmatpush2.bf16.msra.mxu0 0
  %776 = vmatprep.mubr.bf16.mxu0 0
  %777 = vmatmul.mubr.bf16.gmra.mxu0 %v672
  %v778 = vpop.f32.mrf.mxu0
  %v779 = vadd.f32 %v694, %v778
  %v780 = vpop.f32.mrf.mxu0
  %v781 = vpop.f32.mrf.mxu0
  %v782 = vpop.f32.mrf.mxu0
  %783 = vdwg.mxu0
  %v784 = vmax.f32 %v779, 0.0
  %v785 = vpack.c.bf16 %v784, %v784
  %v786 = vld [vmem:[%s5] sm:$0xf]
  %v787 = vld [vmem:[%s5 + $0x4] sm:$0xf]
  %v788 = vld [vmem:[%s5 + $0x8] sm:$0xf]
  %v789 = vld [vmem:[%s5 + $0xc] sm:$0xf]
  %v790 = vld [vmem:[%s5 + $0x10] sm:$0xf]
  %v791 = vld [vmem:[%s5 + $0x14] sm:$0xf]
  %v792 = vld [vmem:[%s5 + $0x18] sm:$0xf]
  %v793 = vld [vmem:[%s5 + $0x1c] sm:$0xf]
  %v794 = vld [vmem:[%s6] sm:$0x1]
  %v796 = vlaneseq
  %v797 = vshrl.u32 %v796, 7
  %v798 = vsub.s32 0, %v797
  %v799 = vrot.slane %v794, %v798
  %v809 = vunpack.c.l.b16 %v786
  %v810 = vunpack.c.l.b16 %v787
  %v811 = vunpack.c.l.b16 %v788
  %v812 = vunpack.c.l.b16 %v789
  %v813 = vunpack.c.l.b16 %v790
  %v814 = vunpack.c.l.b16 %v791
  %v815 = vunpack.c.l.b16 %v792
  %v816 = vunpack.c.l.b16 %v793
  %v817 = vpack.c.b16 %v810, %v809
  %v818 = vpack.c.b16 %v812, %v811
  %v819 = vpack.c.b16 %v814, %v813
  %v820 = vpack.c.b16 %v816, %v815
  %vm825 = vcmask 523264
  %v827 = vsel %vm825, %v785, 0
  %829 = vmatprep.subr.bf16.mxu0 0
  %830 = vmatpush1.bf16.msra.mxu0 0
  %831 = vmatprep.subr.bf16.mxu0 0
  %832 = vmatpush1.bf16.msra.mxu0 0
  %833 = vmatprep.subr.bf16.mxu0 0
  %834 = vmatpush1.bf16.msra.mxu0 0
  %835 = vmatprep.subr.bf16.mxu0 0
  %836 = vmatpush1.bf16.msra.mxu0 0
  %837 = vmatprep.subr.bf16.mxu0 0
  %838 = vmatpush1.bf16.msra.mxu0 %v820
  %839 = vmatprep.subr.bf16.mxu0 0
  %840 = vmatpush1.bf16.msra.mxu0 %v819
  %841 = vmatprep.subr.bf16.mxu0 0
  %842 = vmatpush1.bf16.msra.mxu0 %v818
  %843 = vmatprep.subr.bf16.mxu0 0
  %844 = vmatpush1.bf16.msra.mxu0 %v817
  %845 = vmatprep.subr.bf16.mxu0 0
  %846 = vmatpush2.bf16.msra.mxu0 0
  %847 = vmatprep.subr.bf16.mxu0 0
  %848 = vmatpush2.bf16.msra.mxu0 0
  %849 = vmatprep.subr.bf16.mxu0 0
  %850 = vmatpush2.bf16.msra.mxu0 0
  %851 = vmatprep.subr.bf16.mxu0 0
  %852 = vmatpush2.bf16.msra.mxu0 0
  %853 = vmatprep.subr.bf16.mxu0 0
  %854 = vmatpush2.bf16.msra.mxu0 0
  %855 = vmatprep.subr.bf16.mxu0 0
  %856 = vmatpush2.bf16.msra.mxu0 0
  %857 = vmatprep.subr.bf16.mxu0 0
  %858 = vmatpush2.bf16.msra.mxu0 0
  %859 = vmatprep.subr.bf16.mxu0 0
  %860 = vmatpush2.bf16.msra.mxu0 0
  %861 = vmatprep.mubr.bf16.mxu0 0
  %862 = vmatmul.mubr.bf16.gmra.mxu0 %v827
  %v863 = vpop.f32.mrf.mxu0
  %v864 = vadd.f32 %v799, %v863
  %v865 = vpop.f32.mrf.mxu0
  %v866 = vpop.f32.mrf.mxu0
  %v867 = vpop.f32.mrf.mxu0
  %868 = vdwg.mxu0
  %869 = vst [vmem:[%s7] sm:$0xff] %v864
  // Predicated region
  $region30: #{mlp_forward.1} parent=0 // pred_check
    _
  $region31: #{mlp_forward.1} parent=0 // pred_check_branch
    %871 = sbr.rel (0) target = $region33
  $region32: #{mlp_forward.1} parent=0 // pred_region
    _
  $region33: #{mlp_forward.1} parent=0 // pred_fallthru
    _
  // Predicated region
  $region34: #{mlp_forward.1} parent=0 // pred_check
    _
  $region35: #{mlp_forward.1} parent=0 // pred_check_branch
    %873 = sbr.rel (0) target = $region37
  $region36: #{mlp_forward.1} parent=0 // pred_region
    _
  $region37: #{mlp_forward.1} parent=0 // pred_fallthru
    _

</llo_original>
